<compile_context>
chip_gen: v7x
topology: tpu7x:2x2x1
jax: 0.10.0
libtpu: 0.0.40
codegen_flags: <defaults>
</compile_context>

<pallas_src>
import functools

import jax
import jax.numpy as jnp
from jax.experimental import pallas as pl
from jax.experimental.pallas import tpu as pltpu

EPS = 1e-5       # nn.BatchNorm1d default eps
N_OUT_PAD = 16   # padded output width (real n_classes = 10); bf16 writeback


def _round_up(x, m):
    return ((x + m - 1) // m) * m


def mlresblock_kernel(x_ref, w0_ref, b0_ref, wlist_ref, blist_ref,
                      fc_w_ref, fc_b_ref, out_ref, *, hlayers_n):
    """One batch tile of the whole network.

    x_ref     : (TB, 784)        f32    batch tile of flattened images
    w0_ref    : (784, D)         bf16   BN-folded linear0 weight
    b0_ref    : (1, D)           f32    BN-folded shift for layer 0
    wlist_ref : (2H, D, D)       bf16   BN-folded residual-block weights
    blist_ref : (2H, 1, D)       f32    BN-folded shifts for residual layers
    fc_w_ref  : (D, 16)          bf16   fc weight, zero-padded lanes
    fc_b_ref  : (1, 16)          f32    fc bias,  zero-padded lanes
    out_ref   : (TB, 16)         bf16   logits (padded lanes)
    """
    # Cast x to bf16 on the VPU (free filler under the input DMA), then
    # linear0 (+ folded bn0) -> relu with f32 accumulation.
    xb = x_ref[...].astype(jnp.bfloat16)
    h = jnp.dot(xb, w0_ref[...], preferred_element_type=jnp.float32)
    h = jnp.maximum(h + b0_ref[...], 0.0)

    # Residual blocks (identity_skip=False path).  Statically unrolled; fine
    # for small hlayers_n.
    # TODO(synk): switch to lax.fori_loop with dynamic wlist indexing if
    #             hlayers_n ever grows beyond ~8 (vreg live-range pressure).
    for i in range(hlayers_n):
        skip = h
        t = jnp.dot(h.astype(jnp.bfloat16), wlist_ref[2 * i],
                    preferred_element_type=jnp.float32)
        t = jnp.maximum(t + blist_ref[2 * i], 0.0)
        t = jnp.dot(t.astype(jnp.bfloat16), wlist_ref[2 * i + 1],
                    preferred_element_type=jnp.float32)
        t = t + blist_ref[2 * i + 1]
        h = jnp.maximum(skip + t, 0.0)

    # fc (+ bias).  LogitAdjuster(tau=0) is the identity.  f32 accumulate,
    # bf16 store (logit rounding error ~2^-9 relative, negligible here).
    logits = jnp.dot(h.astype(jnp.bfloat16), fc_w_ref[...],
                     preferred_element_type=jnp.float32)
    out_ref[...] = (logits + fc_b_ref[...]).astype(out_ref.dtype)


def mlresblock_forward(x_img, params, *, hlayers_n, block_b=4096):
    """NCHW input (B, 1, 28, 28) -> logits (B, 10), eval-mode semantics."""
    B = x_img.shape[0]
    D = params["w0"].shape[1]
    n_classes = params["fc_w"].shape[1]

    # ---- host-side parameter prep (tiny, pure algebra / glue) -------------
    # Fold inference-mode BN into the preceding linear:
    #   BN(x @ W) = x @ (W * scale) + (beta - mean * scale)
    scale = params["bn_gamma"] * jax.lax.rsqrt(params["bn_var"] + EPS)   # (n_bn, D)
    shift = params["bn_beta"] - params["bn_mean"] * scale                # (n_bn, D)

    w0 = (params["w0"] * scale[0][None, :]).astype(jnp.bfloat16)         # (784, D)
    b0 = shift[0][None, :].astype(jnp.float32)                           # (1, D)
    wlist = (params["wlist"] * scale[1:][:, None, :]).astype(jnp.bfloat16)  # (2H,D,D)
    blist = shift[1:][:, None, :].astype(jnp.float32)                    # (2H, 1, D)

    # fc: zero-pad 10 -> 16 output lanes (last dim == full array dim in-kernel).
    fc_w = jnp.zeros((D, N_OUT_PAD), jnp.float32)
    fc_w = fc_w.at[:, :n_classes].set(params["fc_w"]).astype(jnp.bfloat16)
    fc_b = jnp.zeros((1, N_OUT_PAD), jnp.float32)
    fc_b = fc_b.at[:, :n_classes].set(params["fc_b"])

    # ---- activations: flatten only (no host cast, no pad copy) ------------
    x = x_img.reshape(B, -1)                                             # (B, 784) f32
    in_dim = x.shape[1]

    block_b = _round_up(block_b, 16)        # bf16-friendly sublane multiple
    if B <= block_b:
        TB = B                              # single block == full array dims
    else:
        TB = block_b                        # ragged tail handled by Pallas masking
    grid = (pl.cdiv(B, TB),)

    kern = functools.partial(mlresblock_kernel, hlayers_n=hlayers_n)
    const2 = lambda b: (0, 0)
    const3 = lambda b: (0, 0, 0)

    out = pl.pallas_call(
        kern,
        out_shape=jax.ShapeDtypeStruct((B, N_OUT_PAD), jnp.bfloat16),
        grid=grid,
        in_specs=[
            # x: tiled over batch; double-buffered by default.  If the trace
            # still shows exposed DMA, bump to pipeline_mode=pl.Buffered(3).
            pl.BlockSpec((TB, in_dim), lambda b: (b, 0)),
            pl.BlockSpec((in_dim, D), const2),                   # weights stay
            pl.BlockSpec((1, D), const2),                        # VMEM-resident
            pl.BlockSpec((2 * hlayers_n, D, D), const3),
            pl.BlockSpec((2 * hlayers_n, 1, D), const3),
            pl.BlockSpec((D, N_OUT_PAD), const2),
            pl.BlockSpec((1, N_OUT_PAD), const2),
        ],
        out_specs=pl.BlockSpec((TB, N_OUT_PAD), lambda b: (b, 0)),
        compiler_params=pltpu.CompilerParams(
            dimension_semantics=("parallel",),
            vmem_limit_bytes=48 * 1024 * 1024,   # fits v7x 64 MiB; v5e/v6e can raise
        ),
    )(x, w0, b0, wlist, blist, fc_w, fc_b)

    return out[:, :n_classes].astype(jnp.float32)


def reference_forward(x_img, params, *, hlayers_n):
    """Pure-JAX f32 reference mirroring the PyTorch eval-mode forward."""
    x = x_img.reshape(x_img.shape[0], -1).astype(jnp.float32)

    def bn(x, i):
        return ((x - params["bn_mean"][i]) / jnp.sqrt(params["bn_var"][i] + EPS)
                * params["bn_gamma"][i] + params["bn_beta"][i])

    hi = jax.lax.Precision.HIGHEST
    x = jnp.dot(x, params["w0"], precision=hi)
    x = jax.nn.relu(bn(x, 0))
    for i in range(hlayers_n):
        skip = x
        x = jnp.dot(x, params["wlist"][2 * i], precision=hi)
        x = jax.nn.relu(bn(x, 1 + 2 * i))
        x = jnp.dot(x, params["wlist"][2 * i + 1], precision=hi)
        x = bn(x, 2 + 2 * i)
        x = jax.nn.relu(skip + x)
    return jnp.dot(x, params["fc_w"], precision=hi) + params["fc_b"]


def init_params(key, *, in_dim=28 * 28, features_d=32, hlayers_n=2, n_classes=10):
    ks = jax.random.split(key, 8)
    n_bn = 1 + 2 * hlayers_n
    return {
        # linear0: nn.Linear(784, D, bias=False) -> stored transposed (784, D)
        "w0": jax.random.normal(ks[0], (in_dim, features_d), jnp.float32)
              / jnp.sqrt(jnp.float32(in_dim)),
        # linearList: 2*H x nn.Linear(D, D, bias=False), stacked (2H, D, D)
        "wlist": jax.random.normal(ks[1], (2 * hlayers_n, features_d, features_d),
                                   jnp.float32) / jnp.sqrt(jnp.float32(features_d)),
        # BatchNorm1d running stats + affine params (bn0 first, then bnList)
        "bn_mean": 0.1 * jax.random.normal(ks[2], (n_bn, features_d), jnp.float32),
        "bn_var": jax.random.uniform(ks[3], (n_bn, features_d), jnp.float32,
                                     minval=0.5, maxval=1.5),
        "bn_gamma": 1.0 + 0.1 * jax.random.normal(ks[4], (n_bn, features_d), jnp.float32),
        "bn_beta": 0.1 * jax.random.normal(ks[5], (n_bn, features_d), jnp.float32),
        # fc: nn.Linear(D, 10) with bias -> stored transposed (D, 10)
        "fc_w": jax.random.normal(ks[6], (features_d, n_classes), jnp.float32)
                / jnp.sqrt(jnp.float32(features_d)),
        "fc_b": jax.random.uniform(ks[7], (1, n_classes), jnp.float32,
                                   minval=-1.0 / features_d, maxval=1.0 / features_d),
    }


if __name__ == "__main__":
    HLAYERS_N = 2      # args.model.mlp_hlayer_n
    FEATURES_D = 32    # args.model.mlp_features_d
    BATCH = 8

    key = jax.random.PRNGKey(0)
    k_params, k_x = jax.random.split(key)
    params = init_params(k_params, features_d=FEATURES_D, hlayers_n=HLAYERS_N)

    # NCHW input like PyTorch (MNIST-style 28x28 single-channel images).
    x_img = jax.random.normal(k_x, (BATCH, 1, 28, 28), jnp.float32)

    fwd = jax.jit(functools.partial(mlresblock_forward, hlayers_n=HLAYERS_N))
    out = fwd(x_img, params)
    out = jax.block_until_ready(out)

    ref = reference_forward(x_img, params, hlayers_n=HLAYERS_N)
    assert out.shape == (BATCH, 10)
    # Kernel intentionally uses bf16 matmul inputs and a bf16 output store
    # (f32 accumulation / epilogue) per the perf review; compare against the
    # f32 HIGHEST-precision reference with a correspondingly relaxed tolerance.
    assert jnp.allclose(out, ref, rtol=5e-2, atol=5e-2), (
        f"mismatch: max abs err = {jnp.max(jnp.abs(out - ref))}")

    print("KERNEL_OK")
</pallas_src>

<mosaic_0001>
module attributes {stable_mosaic.version = 11 : i64} {
  func.func @mlresblock_kernel(%arg0: i32, %arg1: memref<8x784xf32, #tpu.memory_space<vmem>>, %arg2: memref<784x32xbf16, #tpu.memory_space<vmem>>, %arg3: memref<1x32xf32, #tpu.memory_space<vmem>>, %arg4: memref<4x32x32xbf16, #tpu.memory_space<vmem>>, %arg5: memref<4x1x32xf32, #tpu.memory_space<vmem>>, %arg6: memref<32x16xbf16, #tpu.memory_space<vmem>>, %arg7: memref<1x16xf32, #tpu.memory_space<vmem>>, %arg8: memref<8x16xbf16, #tpu.memory_space<vmem>>) attributes {dimension_semantics = [#tpu.dimension_semantics<parallel>], iteration_bounds = array<i64: 1>, scalar_prefetch = 0 : i64, scratch_operands = 0 : i64, tpu.core_type = #tpu.core_type<tc>, window_params = [{transform_indices = @transform_0, window_bounds = array<i64: 8, 784>}, {pipeline_mode = #tpu.pipeline_mode<synchronous>, transform_indices = @transform_1, window_bounds = array<i64: 784, 32>}, {pipeline_mode = #tpu.pipeline_mode<synchronous>, transform_indices = @transform_2, window_bounds = array<i64: 1, 32>}, {pipeline_mode = #tpu.pipeline_mode<synchronous>, transform_indices = @transform_3, window_bounds = array<i64: 4, 32, 32>}, {pipeline_mode = #tpu.pipeline_mode<synchronous>, transform_indices = @transform_4, window_bounds = array<i64: 4, 1, 32>}, {pipeline_mode = #tpu.pipeline_mode<synchronous>, transform_indices = @transform_5, window_bounds = array<i64: 32, 16>}, {pipeline_mode = #tpu.pipeline_mode<synchronous>, transform_indices = @transform_6, window_bounds = array<i64: 1, 16>}, {transform_indices = @transform_7, window_bounds = array<i64: 8, 16>}]} {
    %c0 = arith.constant 0 : index
    %c0_0 = arith.constant 0 : index
    %0 = vector.load %arg1[%c0, %c0_0] : memref<8x784xf32, #tpu.memory_space<vmem>>, vector<8x784xf32>
    %1 = arith.truncf %0 : vector<8x784xf32> to vector<8x784xbf16>
    %c0_1 = arith.constant 0 : index
    %c0_2 = arith.constant 0 : index
    %2 = vector.load %arg2[%c0_1, %c0_2] : memref<784x32xbf16, #tpu.memory_space<vmem>>, vector<784x32xbf16>
    %cst = arith.constant dense<0.000000e+00> : vector<8x32xf32>
    %3 = tpu.matmul %1, %2, %cst {dimension_numbers = #tpu.dot_dimension_numbers<[1], [0], [0], [1], [0, 0, 1, 1], [], []>} : vector<8x784xbf16>, vector<784x32xbf16>, vector<8x32xf32> -> vector<8x32xf32>
    %c0_3 = arith.constant 0 : index
    %c0_4 = arith.constant 0 : index
    %4 = vector.load %arg3[%c0_3, %c0_4] : memref<1x32xf32, #tpu.memory_space<vmem>>, vector<1x32xf32>
    %5 = vector.broadcast %4 : vector<1x32xf32> to vector<8x32xf32>
    %6 = arith.addf %3, %5 : vector<8x32xf32>
    %cst_5 = arith.constant 0.000000e+00 : f32
    %7 = vector.broadcast %cst_5 : f32 to vector<8x32xf32>
    %8 = arith.maximumf %6, %7 : vector<8x32xf32>
    %9 = arith.truncf %8 : vector<8x32xf32> to vector<8x32xbf16>
    %c0_6 = arith.constant 0 : index
    %c0_7 = arith.constant 0 : index
    %c0_8 = arith.constant 0 : index
    %10 = vector.load %arg4[%c0_6, %c0_7, %c0_8] : memref<4x32x32xbf16, #tpu.memory_space<vmem>>, vector<1x32x32xbf16>
    %11 = vector.shape_cast %10 : vector<1x32x32xbf16> to vector<32x32xbf16>
    %cst_9 = arith.constant dense<0.000000e+00> : vector<8x32xf32>
    %12 = tpu.matmul %9, %11, %cst_9 {dimension_numbers = #tpu.dot_dimension_numbers<[1], [0], [0], [1], [0, 0, 1, 1], [], []>} : vector<8x32xbf16>, vector<32x32xbf16>, vector<8x32xf32> -> vector<8x32xf32>
    %c0_10 = arith.constant 0 : index
    %c0_11 = arith.constant 0 : index
    %c0_12 = arith.constant 0 : index
    %13 = vector.load %arg5[%c0_10, %c0_11, %c0_12] : memref<4x1x32xf32, #tpu.memory_space<vmem>>, vector<1x1x32xf32>
    %14 = vector.shape_cast %13 : vector<1x1x32xf32> to vector<1x32xf32>
    %15 = vector.broadcast %14 : vector<1x32xf32> to vector<8x32xf32>
    %16 = arith.addf %12, %15 : vector<8x32xf32>
    %cst_13 = arith.constant 0.000000e+00 : f32
    %17 = vector.broadcast %cst_13 : f32 to vector<8x32xf32>
    %18 = arith.maximumf %16, %17 : vector<8x32xf32>
    %19 = arith.truncf %18 : vector<8x32xf32> to vector<8x32xbf16>
    %c1 = arith.constant 1 : index
    %c0_14 = arith.constant 0 : index
    %c0_15 = arith.constant 0 : index
    %20 = vector.load %arg4[%c1, %c0_14, %c0_15] : memref<4x32x32xbf16, #tpu.memory_space<vmem>>, vector<1x32x32xbf16>
    %21 = vector.shape_cast %20 : vector<1x32x32xbf16> to vector<32x32xbf16>
    %cst_16 = arith.constant dense<0.000000e+00> : vector<8x32xf32>
    %22 = tpu.matmul %19, %21, %cst_16 {dimension_numbers = #tpu.dot_dimension_numbers<[1], [0], [0], [1], [0, 0, 1, 1], [], []>} : vector<8x32xbf16>, vector<32x32xbf16>, vector<8x32xf32> -> vector<8x32xf32>
    %c1_17 = arith.constant 1 : index
    %c0_18 = arith.constant 0 : index
    %c0_19 = arith.constant 0 : index
    %23 = vector.load %arg5[%c1_17, %c0_18, %c0_19] : memref<4x1x32xf32, #tpu.memory_space<vmem>>, vector<1x1x32xf32>
    %24 = vector.shape_cast %23 : vector<1x1x32xf32> to vector<1x32xf32>
    %25 = vector.broadcast %24 : vector<1x32xf32> to vector<8x32xf32>
    %26 = arith.addf %22, %25 : vector<8x32xf32>
    %27 = arith.addf %8, %26 : vector<8x32xf32>
    %cst_20 = arith.constant 0.000000e+00 : f32
    %28 = vector.broadcast %cst_20 : f32 to vector<8x32xf32>
    %29 = arith.maximumf %27, %28 : vector<8x32xf32>
    %30 = arith.truncf %29 : vector<8x32xf32> to vector<8x32xbf16>
    %c2 = arith.constant 2 : index
    %c0_21 = arith.constant 0 : index
    %c0_22 = arith.constant 0 : index
    %31 = vector.load %arg4[%c2, %c0_21, %c0_22] : memref<4x32x32xbf16, #tpu.memory_space<vmem>>, vector<1x32x32xbf16>
    %32 = vector.shape_cast %31 : vector<1x32x32xbf16> to vector<32x32xbf16>
    %cst_23 = arith.constant dense<0.000000e+00> : vector<8x32xf32>
    %33 = tpu.matmul %30, %32, %cst_23 {dimension_numbers = #tpu.dot_dimension_numbers<[1], [0], [0], [1], [0, 0, 1, 1], [], []>} : vector<8x32xbf16>, vector<32x32xbf16>, vector<8x32xf32> -> vector<8x32xf32>
    %c2_24 = arith.constant 2 : index
    %c0_25 = arith.constant 0 : index
    %c0_26 = arith.constant 0 : index
    %34 = vector.load %arg5[%c2_24, %c0_25, %c0_26] : memref<4x1x32xf32, #tpu.memory_space<vmem>>, vector<1x1x32xf32>
    %35 = vector.shape_cast %34 : vector<1x1x32xf32> to vector<1x32xf32>
    %36 = vector.broadcast %35 : vector<1x32xf32> to vector<8x32xf32>
    %37 = arith.addf %33, %36 : vector<8x32xf32>
    %cst_27 = arith.constant 0.000000e+00 : f32
    %38 = vector.broadcast %cst_27 : f32 to vector<8x32xf32>
    %39 = arith.maximumf %37, %38 : vector<8x32xf32>
    %40 = arith.truncf %39 : vector<8x32xf32> to vector<8x32xbf16>
    %c3 = arith.constant 3 : index
    %c0_28 = arith.constant 0 : index
    %c0_29 = arith.constant 0 : index
    %41 = vector.load %arg4[%c3, %c0_28, %c0_29] : memref<4x32x32xbf16, #tpu.memory_space<vmem>>, vector<1x32x32xbf16>
    %42 = vector.shape_cast %41 : vector<1x32x32xbf16> to vector<32x32xbf16>
    %cst_30 = arith.constant dense<0.000000e+00> : vector<8x32xf32>
    %43 = tpu.matmul %40, %42, %cst_30 {dimension_numbers = #tpu.dot_dimension_numbers<[1], [0], [0], [1], [0, 0, 1, 1], [], []>} : vector<8x32xbf16>, vector<32x32xbf16>, vector<8x32xf32> -> vector<8x32xf32>
    %c3_31 = arith.constant 3 : index
    %c0_32 = arith.constant 0 : index
    %c0_33 = arith.constant 0 : index
    %44 = vector.load %arg5[%c3_31, %c0_32, %c0_33] : memref<4x1x32xf32, #tpu.memory_space<vmem>>, vector<1x1x32xf32>
    %45 = vector.shape_cast %44 : vector<1x1x32xf32> to vector<1x32xf32>
    %46 = vector.broadcast %45 : vector<1x32xf32> to vector<8x32xf32>
    %47 = arith.addf %43, %46 : vector<8x32xf32>
    %48 = arith.addf %29, %47 : vector<8x32xf32>
    %cst_34 = arith.constant 0.000000e+00 : f32
    %49 = vector.broadcast %cst_34 : f32 to vector<8x32xf32>
    %50 = arith.maximumf %48, %49 : vector<8x32xf32>
    %51 = arith.truncf %50 : vector<8x32xf32> to vector<8x32xbf16>
    %c0_35 = arith.constant 0 : index
    %c0_36 = arith.constant 0 : index
    %52 = vector.load %arg6[%c0_35, %c0_36] : memref<32x16xbf16, #tpu.memory_space<vmem>>, vector<32x16xbf16>
    %cst_37 = arith.constant dense<0.000000e+00> : vector<8x16xf32>
    %53 = tpu.matmul %51, %52, %cst_37 {dimension_numbers = #tpu.dot_dimension_numbers<[1], [0], [0], [1], [0, 0, 1, 1], [], []>} : vector<8x32xbf16>, vector<32x16xbf16>, vector<8x16xf32> -> vector<8x16xf32>
    %c0_38 = arith.constant 0 : index
    %c0_39 = arith.constant 0 : index
    %54 = vector.load %arg7[%c0_38, %c0_39] : memref<1x16xf32, #tpu.memory_space<vmem>>, vector<1x16xf32>
    %55 = vector.broadcast %54 : vector<1x16xf32> to vector<8x16xf32>
    %56 = arith.addf %53, %55 : vector<8x16xf32>
    %57 = arith.truncf %56 : vector<8x16xf32> to vector<8x16xbf16>
    %c0_40 = arith.constant 0 : index
    %c0_41 = arith.constant 0 : index
    %58 = vector.load %arg8[%c0_40, %c0_41] : memref<8x16xbf16, #tpu.memory_space<vmem>>, vector<8x16xbf16>
    tpu.vector_store %arg8[%c0_40, %c0_41], %57 {strides = array<i32>} : memref<8x16xbf16, #tpu.memory_space<vmem>>, vector<8x16xbf16>,
    return
  }
  func.func @transform_0(%arg0: i32) -> (i32, i32) {
    %c0_i32 = arith.constant 0 : i32
    %c0_i32_0 = arith.constant 0 : i32
    return %arg0, %c0_i32 : i32, i32
  }
  func.func @transform_1(%arg0: i32) -> (i32, i32) {
    %c0_i32 = arith.constant 0 : i32
    %c0_i32_0 = arith.constant 0 : i32
    %c0_i32_1 = arith.constant 0 : i32
    return %c0_i32, %c0_i32_0 : i32, i32
  }
  func.func @transform_2(%arg0: i32) -> (i32, i32) {
    %c0_i32 = arith.constant 0 : i32
    %c0_i32_0 = arith.constant 0 : i32
    %c0_i32_1 = arith.constant 0 : i32
    return %c0_i32, %c0_i32_0 : i32, i32
  }
  func.func @transform_3(%arg0: i32) -> (i32, i32, i32) {
    %c0_i32 = arith.constant 0 : i32
    %c0_i32_0 = arith.constant 0 : i32
    %c0_i32_1 = arith.constant 0 : i32
    %c0_i32_2 = arith.constant 0 : i32
    return %c0_i32, %c0_i32_0, %c0_i32_1 : i32, i32, i32
  }
  func.func @transform_4(%arg0: i32) -> (i32, i32, i32) {
    %c0_i32 = arith.constant 0 : i32
    %c0_i32_0 = arith.constant 0 : i32
    %c0_i32_1 = arith.constant 0 : i32
    %c0_i32_2 = arith.constant 0 : i32
    return %c0_i32, %c0_i32_0, %c0_i32_1 : i32, i32, i32
  }
  func.func @transform_5(%arg0: i32) -> (i32, i32) {
    %c0_i32 = arith.constant 0 : i32
    %c0_i32_0 = arith.constant 0 : i32
    %c0_i32_1 = arith.constant 0 : i32
    return %c0_i32, %c0_i32_0 : i32, i32
  }
  func.func @transform_6(%arg0: i32) -> (i32, i32) {
    %c0_i32 = arith.constant 0 : i32
    %c0_i32_0 = arith.constant 0 : i32
    %c0_i32_1 = arith.constant 0 : i32
    return %c0_i32, %c0_i32_0 : i32, i32
  }
  func.func @transform_7(%arg0: i32) -> (i32, i32) {
    %c0_i32 = arith.constant 0 : i32
    %c0_i32_0 = arith.constant 0 : i32
    return %arg0, %c0_i32 : i32, i32
  }
}

</mosaic_0001>

<llo_original>
// kernel: mlresblock_forward.1
$region0: #{mlresblock_forward.1}
  #allocation0 [shape = 'u32[]', space=smem, size = 0x4, offset = 0x4, fixed_abs, tag = 'smem constant byte address 0x4 - core index']
  #allocation1 [shape = 'u32[144,128]{1,0:T(1,128)}', space=vmem, size = 0x12000, scoped, tag = 'internal scratch']
  %s0 = inlined_call_operand.vmem [shape: f32[8,784], index: 0, kind: input, shape index: {}]
  %s1 = inlined_call_operand.vmem [shape: bf16[784,32], index: 1, kind: input, shape index: {}]
  %s2 = inlined_call_operand.vmem [shape: f32[1,32], index: 2, kind: input, shape index: {}]
  %s3 = inlined_call_operand.vmem [shape: bf16[4,32,32], index: 3, kind: input, shape index: {}]
  %s4 = inlined_call_operand.vmem [shape: f32[4,1,32], index: 4, kind: input, shape index: {}]
  %s5 = inlined_call_operand.vmem [shape: bf16[32,16], index: 5, kind: input, shape index: {}]
  %s6 = inlined_call_operand.vmem [shape: f32[1,16], index: 6, kind: input, shape index: {}]
  %s7 = inlined_call_operand.vmem [shape: bf16[8,16], index: 7, kind: output, shape index: {}]
  %s8 = sld [smem:[#allocation0]]
  $region38: #{mlresblock_forward.1} parent=0
    _
  %s10 = ssub.s32 1, %s8
  %s11 = scalar_select 0, %s10, %s8
  // Predicated region
  $region2: #{mlresblock_forward.1} parent=0 // pred_check
    _
  $region3: #{mlresblock_forward.1} parent=0 // pred_check_branch
    %13 = sbr.rel (0) target = $region5
  $region4: #{mlresblock_forward.1} parent=0 // pred_region
    _
  $region5: #{mlresblock_forward.1} parent=0 // pred_fallthru
    _
  // Predicated region
  $region6: #{mlresblock_forward.1} parent=0 // pred_check
    _
  $region7: #{mlresblock_forward.1} parent=0 // pred_check_branch
    %15 = sbr.rel (0) target = $region9
  $region8: #{mlresblock_forward.1} parent=0 // pred_region
    _
  $region9: #{mlresblock_forward.1} parent=0 // pred_fallthru
    _
  // Predicated region
  $region10: #{mlresblock_forward.1} parent=0 // pred_check
    _
  $region11: #{mlresblock_forward.1} parent=0 // pred_check_branch
    %17 = sbr.rel (0) target = $region13
  $region12: #{mlresblock_forward.1} parent=0 // pred_region
    _
  $region13: #{mlresblock_forward.1} parent=0 // pred_fallthru
    _
  // Predicated region
  $region14: #{mlresblock_forward.1} parent=0 // pred_check
    _
  $region15: #{mlresblock_forward.1} parent=0 // pred_check_branch
    %19 = sbr.rel (0) target = $region17
  $region16: #{mlresblock_forward.1} parent=0 // pred_region
    _
  $region17: #{mlresblock_forward.1} parent=0 // pred_fallthru
    _
  // Predicated region
  $region18: #{mlresblock_forward.1} parent=0 // pred_check
    _
  $region19: #{mlresblock_forward.1} parent=0 // pred_check_branch
    %21 = sbr.rel (0) target = $region21
  $region20: #{mlresblock_forward.1} parent=0 // pred_region
    _
  $region21: #{mlresblock_forward.1} parent=0 // pred_fallthru
    _
  // Predicated region
  $region22: #{mlresblock_forward.1} parent=0 // pred_check
    _
  $region23: #{mlresblock_forward.1} parent=0 // pred_check_branch
    %23 = sbr.rel (0) target = $region25
  $region24: #{mlresblock_forward.1} parent=0 // pred_region
    _
  $region25: #{mlresblock_forward.1} parent=0 // pred_fallthru
    _
  // Predicated region
  $region26: #{mlresblock_forward.1} parent=0 // pred_check
    _
  $region27: #{mlresblock_forward.1} parent=0 // pred_check_branch
    %25 = sbr.rel (0) target = $region29
  $region28: #{mlresblock_forward.1} parent=0 // pred_region
    _
  $region29: #{mlresblock_forward.1} parent=0 // pred_fallthru
    _
  %v27 = vld [vmem:[%s0] sm:$0xff]
  %v28 = vld [vmem:[%s0 + $0x8] sm:$0xff]
  %v29 = vld [vmem:[%s0 + $0x10] sm:$0xff]
  %v30 = vld [vmem:[%s0 + $0x18] sm:$0xff]
  %v31 = vld [vmem:[%s0 + $0x20] sm:$0xff]
  %v32 = vld [vmem:[%s0 + $0x28] sm:$0xff]
  %v33 = vld [vmem:[%s0 + $0x30] sm:$0xff]
  %v34 = vpack.c.bf16 %v27, %v27
  %v35 = vpack.c.bf16 %v28, %v28
  %v36 = vpack.c.bf16 %v29, %v29
  %v37 = vpack.c.bf16 %v30, %v30
  %v38 = vpack.c.bf16 %v31, %v31
  %v39 = vpack.c.bf16 %v32, %v32
  %v40 = vpack.c.bf16 %v33, %v33
  %v41 = vld [vmem:[%s1] sm:$0xf]
  %v42 = vld [vmem:[%s1 + $0x4] sm:$0xf]
  %v43 = vld [vmem:[%s1 + $0x8] sm:$0xf]
  %v44 = vld [vmem:[%s1 + $0xc] sm:$0xf]
  %v45 = vld [vmem:[%s1 + $0x10] sm:$0xf]
  %v46 = vld [vmem:[%s1 + $0x14] sm:$0xf]
  %v47 = vld [vmem:[%s1 + $0x18] sm:$0xf]
  %v48 = vld [vmem:[%s1 + $0x1c] sm:$0xf]
  %v49 = vld [vmem:[%s1 + $0x20] sm:$0xf]
  %v50 = vld [vmem:[%s1 + $0x24] sm:$0xf]
  %v51 = vld [vmem:[%s1 + $0x28] sm:$0xf]
  %v52 = vld [vmem:[%s1 + $0x2c] sm:$0xf]
  %v53 = vld [vmem:[%s1 + $0x30] sm:$0xf]
  %v54 = vld [vmem:[%s1 + $0x34] sm:$0xf]
  %v55 = vld [vmem:[%s1 + $0x38] sm:$0xf]
  %v56 = vld [vmem:[%s1 + $0x3c] sm:$0xf]
  %v57 = vld [vmem:[%s1 + $0x40] sm:$0xf]
  %v58 = vld [vmem:[%s1 + $0x44] sm:$0xf]
  %v59 = vld [vmem:[%s1 + $0x48] sm:$0xf]
  %v60 = vld [vmem:[%s1 + $0x4c] sm:$0xf]
  %v61 = vld [vmem:[%s1 + $0x50] sm:$0xf]
  %v62 = vld [vmem:[%s1 + $0x54] sm:$0xf]
  %v63 = vld [vmem:[%s1 + $0x58] sm:$0xf]
  %v64 = vld [vmem:[%s1 + $0x5c] sm:$0xf]
  %v65 = vld [vmem:[%s1 + $0x60] sm:$0xf]
  %v66 = vld [vmem:[%s1 + $0x64] sm:$0xf]
  %v67 = vld [vmem:[%s1 + $0x68] sm:$0xf]
  %v68 = vld [vmem:[%s1 + $0x6c] sm:$0xf]
  %v69 = vld [vmem:[%s1 + $0x70] sm:$0xf]
  %v70 = vld [vmem:[%s1 + $0x74] sm:$0xf]
  %v71 = vld [vmem:[%s1 + $0x78] sm:$0xf]
  %v72 = vld [vmem:[%s1 + $0x7c] sm:$0xf]
  %v73 = vld [vmem:[%s1 + $0x80] sm:$0xf]
  %v74 = vld [vmem:[%s1 + $0x84] sm:$0xf]
  %v75 = vld [vmem:[%s1 + $0x88] sm:$0xf]
  %v76 = vld [vmem:[%s1 + $0x8c] sm:$0xf]
  %v77 = vld [vmem:[%s1 + $0x90] sm:$0xf]
  %v78 = vld [vmem:[%s1 + $0x94] sm:$0xf]
  %v79 = vld [vmem:[%s1 + $0x98] sm:$0xf]
  %v80 = vld [vmem:[%s1 + $0x9c] sm:$0xf]
  %v81 = vld [vmem:[%s1 + $0xa0] sm:$0xf]
  %v82 = vld [vmem:[%s1 + $0xa4] sm:$0xf]
  %v83 = vld [vmem:[%s1 + $0xa8] sm:$0xf]
  %v84 = vld [vmem:[%s1 + $0xac] sm:$0xf]
  %v85 = vld [vmem:[%s1 + $0xb0] sm:$0xf]
  %v86 = vld [vmem:[%s1 + $0xb4] sm:$0xf]
  %v87 = vld [vmem:[%s1 + $0xb8] sm:$0xf]
  %v88 = vld [vmem:[%s1 + $0xbc] sm:$0xf]
  %v89 = vld [vmem:[%s1 + $0xc0] sm:$0xf]
  %v90 = vld [vmem:[%s1 + $0xc4] sm:$0xf]
  %v91 = vld [vmem:[%s1 + $0xc8] sm:$0xf]
  %v92 = vld [vmem:[%s1 + $0xcc] sm:$0xf]
  %v93 = vld [vmem:[%s1 + $0xd0] sm:$0xf]
  %v94 = vld [vmem:[%s1 + $0xd4] sm:$0xf]
  %v95 = vld [vmem:[%s1 + $0xd8] sm:$0xf]
  %v96 = vld [vmem:[%s1 + $0xdc] sm:$0xf]
  %v97 = vld [vmem:[%s1 + $0xe0] sm:$0xf]
  %v98 = vld [vmem:[%s1 + $0xe4] sm:$0xf]
  %v99 = vld [vmem:[%s1 + $0xe8] sm:$0xf]
  %v100 = vld [vmem:[%s1 + $0xec] sm:$0xf]
  %v101 = vld [vmem:[%s1 + $0xf0] sm:$0xf]
  %v102 = vld [vmem:[%s1 + $0xf4] sm:$0xf]
  %v103 = vld [vmem:[%s1 + $0xf8] sm:$0xf]
  %v104 = vld [vmem:[%s1 + $0xfc] sm:$0xf]
  %v105 = vld [vmem:[%s1 + $0x100] sm:$0xf]
  %v106 = vld [vmem:[%s1 + $0x104] sm:$0xf]
  %v107 = vld [vmem:[%s1 + $0x108] sm:$0xf]
  %v108 = vld [vmem:[%s1 + $0x10c] sm:$0xf]
  %v109 = vld [vmem:[%s1 + $0x110] sm:$0xf]
  %v110 = vld [vmem:[%s1 + $0x114] sm:$0xf]
  %v111 = vld [vmem:[%s1 + $0x118] sm:$0xf]
  %v112 = vld [vmem:[%s1 + $0x11c] sm:$0xf]
  %v113 = vld [vmem:[%s1 + $0x120] sm:$0xf]
  %v114 = vld [vmem:[%s1 + $0x124] sm:$0xf]
  %v115 = vld [vmem:[%s1 + $0x128] sm:$0xf]
  %v116 = vld [vmem:[%s1 + $0x12c] sm:$0xf]
  %v117 = vld [vmem:[%s1 + $0x130] sm:$0xf]
  %v118 = vld [vmem:[%s1 + $0x134] sm:$0xf]
  %v119 = vld [vmem:[%s1 + $0x138] sm:$0xf]
  %v120 = vld [vmem:[%s1 + $0x13c] sm:$0xf]
  %v121 = vld [vmem:[%s1 + $0x140] sm:$0xf]
  %v122 = vld [vmem:[%s1 + $0x144] sm:$0xf]
  %v123 = vld [vmem:[%s1 + $0x148] sm:$0xf]
  %v124 = vld [vmem:[%s1 + $0x14c] sm:$0xf]
  %v125 = vld [vmem:[%s1 + $0x150] sm:$0xf]
  %v126 = vld [vmem:[%s1 + $0x154] sm:$0xf]
  %v127 = vld [vmem:[%s1 + $0x158] sm:$0xf]
  %v128 = vld [vmem:[%s1 + $0x15c] sm:$0xf]
  %v129 = vld [vmem:[%s1 + $0x160] sm:$0xf]
  %v130 = vld [vmem:[%s1 + $0x164] sm:$0xf]
  %v131 = vld [vmem:[%s1 + $0x168] sm:$0xf]
  %v132 = vld [vmem:[%s1 + $0x16c] sm:$0xf]
  %v133 = vld [vmem:[%s1 + $0x170] sm:$0xf]
  %v134 = vld [vmem:[%s1 + $0x174] sm:$0xf]
  %v135 = vld [vmem:[%s1 + $0x178] sm:$0xf]
  %v136 = vld [vmem:[%s1 + $0x17c] sm:$0xf]
  %v137 = vld [vmem:[%s1 + $0x180] sm:$0xf]
  %v138 = vld [vmem:[%s1 + $0x184] sm:$0xf]
  %v139 = vld [vmem:[%s2] sm:$0x1]
  %v141 = vlaneseq
  %v142 = vshrl.u32 %v141, 7
  %v143 = vsub.s32 0, %v142
  %v144 = vrot.slane %v139, %v143
  %v244 = vunpack.c.l.b16 %v41
  %v245 = vunpack.c.l.b16 %v42
  %v246 = vunpack.c.l.b16 %v43
  %v247 = vunpack.c.l.b16 %v44
  %v248 = vunpack.c.l.b16 %v45
  %v249 = vunpack.c.l.b16 %v46
  %v250 = vunpack.c.l.b16 %v47
  %v251 = vunpack.c.l.b16 %v48
  %v252 = vunpack.c.l.b16 %v49
  %v253 = vunpack.c.l.b16 %v50
  %v254 = vunpack.c.l.b16 %v51
  %v255 = vunpack.c.l.b16 %v52
  %v256 = vunpack.c.l.b16 %v53
  %v257 = vunpack.c.l.b16 %v54
  %v258 = vunpack.c.l.b16 %v55
  %v259 = vunpack.c.l.b16 %v56
  %v260 = vunpack.c.l.b16 %v57
  %v261 = vunpack.c.l.b16 %v58
  %v262 = vunpack.c.l.b16 %v59
  %v263 = vunpack.c.l.b16 %v60
  %v264 = vunpack.c.l.b16 %v61
  %v265 = vunpack.c.l.b16 %v62
  %v266 = vunpack.c.l.b16 %v63
  %v267 = vunpack.c.l.b16 %v64
  %v268 = vunpack.c.l.b16 %v65
  %v269 = vunpack.c.l.b16 %v66
  %v270 = vunpack.c.l.b16 %v67
  %v271 = vunpack.c.l.b16 %v68
  %v272 = vunpack.c.l.b16 %v69
  %v273 = vunpack.c.l.b16 %v70
  %v274 = vunpack.c.l.b16 %v71
  %v275 = vunpack.c.l.b16 %v72
  %v276 = vunpack.c.l.b16 %v73
  %v277 = vunpack.c.l.b16 %v74
  %v278 = vunpack.c.l.b16 %v75
  %v279 = vunpack.c.l.b16 %v76
  %v280 = vunpack.c.l.b16 %v77
  %v281 = vunpack.c.l.b16 %v78
  %v282 = vunpack.c.l.b16 %v79
  %v283 = vunpack.c.l.b16 %v80
  %v284 = vunpack.c.l.b16 %v81
  %v285 = vunpack.c.l.b16 %v82
  %v286 = vunpack.c.l.b16 %v83
  %v287 = vunpack.c.l.b16 %v84
  %v288 = vunpack.c.l.b16 %v85
  %v289 = vunpack.c.l.b16 %v86
  %v290 = vunpack.c.l.b16 %v87
  %v291 = vunpack.c.l.b16 %v88
  %v292 = vunpack.c.l.b16 %v89
  %v293 = vunpack.c.l.b16 %v90
  %v294 = vunpack.c.l.b16 %v91
  %v295 = vunpack.c.l.b16 %v92
  %v296 = vunpack.c.l.b16 %v93
  %v297 = vunpack.c.l.b16 %v94
  %v298 = vunpack.c.l.b16 %v95
  %v299 = vunpack.c.l.b16 %v96
  %v300 = vunpack.c.l.b16 %v97
  %v301 = vunpack.c.l.b16 %v98
  %v302 = vunpack.c.l.b16 %v99
  %v303 = vunpack.c.l.b16 %v100
  %v304 = vunpack.c.l.b16 %v101
  %v305 = vunpack.c.l.b16 %v102
  %v306 = vunpack.c.l.b16 %v103
  %v307 = vunpack.c.l.b16 %v104
  %v308 = vunpack.c.l.b16 %v105
  %v309 = vunpack.c.l.b16 %v106
  %v310 = vunpack.c.l.b16 %v107
  %v311 = vunpack.c.l.b16 %v108
  %v312 = vunpack.c.l.b16 %v109
  %v313 = vunpack.c.l.b16 %v110
  %v314 = vunpack.c.l.b16 %v111
  %v315 = vunpack.c.l.b16 %v112
  %v316 = vunpack.c.l.b16 %v113
  %v317 = vunpack.c.l.b16 %v114
  %v318 = vunpack.c.l.b16 %v115
  %v319 = vunpack.c.l.b16 %v116
  %v320 = vunpack.c.l.b16 %v117
  %v321 = vunpack.c.l.b16 %v118
  %v322 = vunpack.c.l.b16 %v119
  %v323 = vunpack.c.l.b16 %v120
  %v324 = vunpack.c.l.b16 %v121
  %v325 = vunpack.c.l.b16 %v122
  %v326 = vunpack.c.l.b16 %v123
  %v327 = vunpack.c.l.b16 %v124
  %v328 = vunpack.c.l.b16 %v125
  %v329 = vunpack.c.l.b16 %v126
  %v330 = vunpack.c.l.b16 %v127
  %v331 = vunpack.c.l.b16 %v128
  %v332 = vunpack.c.l.b16 %v129
  %v333 = vunpack.c.l.b16 %v130
  %v334 = vunpack.c.l.b16 %v131
  %v335 = vunpack.c.l.b16 %v132
  %v336 = vunpack.c.l.b16 %v133
  %v337 = vunpack.c.l.b16 %v134
  %v338 = vunpack.c.l.b16 %v135
  %v339 = vunpack.c.l.b16 %v136
  %v340 = vunpack.c.l.b16 %v137
  %v341 = vunpack.c.l.b16 %v138
  %v342 = vpack.c.b16 %v245, %v244
  %v343 = vpack.c.b16 %v247, %v246
  %v344 = vpack.c.b16 %v249, %v248
  %v345 = vpack.c.b16 %v251, %v250
  %v346 = vpack.c.b16 %v253, %v252
  %v347 = vpack.c.b16 %v255, %v254
  %v348 = vpack.c.b16 %v257, %v256
  %v349 = vpack.c.b16 %v259, %v258
  %v350 = vpack.c.b16 %v261, %v260
  %v351 = vpack.c.b16 %v263, %v262
  %v352 = vpack.c.b16 %v265, %v264
  %v353 = vpack.c.b16 %v267, %v266
  %v354 = vpack.c.b16 %v269, %v268
  %v355 = vpack.c.b16 %v271, %v270
  %v356 = vpack.c.b16 %v273, %v272
  %v357 = vpack.c.b16 %v275, %v274
  %v358 = vpack.c.b16 %v277, %v276
  %v359 = vpack.c.b16 %v279, %v278
  %v360 = vpack.c.b16 %v281, %v280
  %v361 = vpack.c.b16 %v283, %v282
  %v362 = vpack.c.b16 %v285, %v284
  %v363 = vpack.c.b16 %v287, %v286
  %v364 = vpack.c.b16 %v289, %v288
  %v365 = vpack.c.b16 %v291, %v290
  %v366 = vpack.c.b16 %v293, %v292
  %v367 = vpack.c.b16 %v295, %v294
  %v368 = vpack.c.b16 %v297, %v296
  %v369 = vpack.c.b16 %v299, %v298
  %v370 = vpack.c.b16 %v301, %v300
  %v371 = vpack.c.b16 %v303, %v302
  %v372 = vpack.c.b16 %v305, %v304
  %v373 = vpack.c.b16 %v307, %v306
  %v374 = vpack.c.b16 %v309, %v308
  %v375 = vpack.c.b16 %v311, %v310
  %v376 = vpack.c.b16 %v313, %v312
  %v377 = vpack.c.b16 %v315, %v314
  %v378 = vpack.c.b16 %v317, %v316
  %v379 = vpack.c.b16 %v319, %v318
  %v380 = vpack.c.b16 %v321, %v320
  %v381 = vpack.c.b16 %v323, %v322
  %v382 = vpack.c.b16 %v325, %v324
  %v383 = vpack.c.b16 %v327, %v326
  %v384 = vpack.c.b16 %v329, %v328
  %v385 = vpack.c.b16 %v331, %v330
  %v386 = vpack.c.b16 %v333, %v332
  %v387 = vpack.c.b16 %v335, %v334
  %v388 = vpack.c.b16 %v337, %v336
  %v389 = vpack.c.b16 %v339, %v338
  %v390 = vpack.c.b16 %v341, %v340
  %vm440 = vcmask 130048
  %v442 = vsel %vm440, %v40, 0
  %444 = vmatprep.subr.bf16.mxu0 0
  %445 = vmatpush1.bf16.msra.mxu0 %v342
  %446 = vmatprep.subr.bf16.mxu0 0
  %447 = vmatpush1.bf16.msra.mxu0 %v343
  %448 = vmatprep.subr.bf16.mxu0 0
  %449 = vmatpush1.bf16.msra.mxu0 %v344
  %450 = vmatprep.subr.bf16.mxu0 0
  %451 = vmatpush1.bf16.msra.mxu0 %v345
  %452 = vmatprep.subr.bf16.mxu0 0
  %453 = vmatpush1.bf16.msra.mxu0 %v346
  %454 = vmatprep.subr.bf16.mxu0 0
  %455 = vmatpush1.bf16.msra.mxu0 %v347
  %456 = vmatprep.subr.bf16.mxu0 0
  %457 = vmatpush1.bf16.msra.mxu0 %v348
  %458 = vmatprep.subr.bf16.mxu0 0
  %459 = vmatpush1.bf16.msra.mxu0 %v349
  %460 = vmatprep.subr.bf16.mxu0 0
  %461 = vmatpush1.bf16.msra.mxu0 %v350
  %462 = vmatprep.subr.bf16.mxu0 0
  %463 = vmatpush1.bf16.msra.mxu0 %v351
  %464 = vmatprep.subr.bf16.mxu0 0
  %465 = vmatpush1.bf16.msra.mxu0 %v352
  %466 = vmatprep.subr.bf16.mxu0 0
  %467 = vmatpush1.bf16.msra.mxu0 %v353
  %468 = vmatprep.subr.bf16.mxu0 0
  %469 = vmatpush1.bf16.msra.mxu0 %v354
  %470 = vmatprep.subr.bf16.mxu0 0
  %471 = vmatpush1.bf16.msra.mxu0 %v355
  %472 = vmatprep.subr.bf16.mxu0 0
  %473 = vmatpush1.bf16.msra.mxu0 %v356
  %474 = vmatprep.subr.bf16.mxu0 0
  %475 = vmatpush1.bf16.msra.mxu0 %v357
  %476 = vmatprep.mubr.bf16.mxu0 %v35
  %477 = vmatmul.mubr.bf16.gmra.mrb[0].mxu0 %v34
  %v478 = vpop.f32.mrb[0].mxu0
  %v479 = vadd.f32 %v144, %v478
  %v480 = vpop.f32.mrb[0].mxu0
  %v481 = vpop.f32.mrb[0].mxu0
  %v482 = vpop.f32.mrb[0].mxu0
  %483 = vdwg.mxu0
  %484 = vmatprep.subr.bf16.mxu0 0
  %485 = vmatpush1.bf16.msra.mxu0 %v358
  %486 = vmatprep.subr.bf16.mxu0 0
  %487 = vmatpush1.bf16.msra.mxu0 %v359
  %488 = vmatprep.subr.bf16.mxu0 0
  %489 = vmatpush1.bf16.msra.mxu0 %v360
  %490 = vmatprep.subr.bf16.mxu0 0
  %491 = vmatpush1.bf16.msra.mxu0 %v361
  %492 = vmatprep.subr.bf16.mxu0 0
  %493 = vmatpush1.bf16.msra.mxu0 %v362
  %494 = vmatprep.subr.bf16.mxu0 0
  %495 = vmatpush1.bf16.msra.mxu0 %v363
  %496 = vmatprep.subr.bf16.mxu0 0
  %497 = vmatpush1.bf16.msra.mxu0 %v364
  %498 = vmatprep.subr.bf16.mxu0 0
  %499 = vmatpush1.bf16.msra.mxu0 %v365
  %500 = vmatprep.subr.bf16.mxu0 0
  %501 = vmatpush1.bf16.msra.mxu0 %v366
  %502 = vmatprep.subr.bf16.mxu0 0
  %503 = vmatpush1.bf16.msra.mxu0 %v367
  %504 = vmatprep.subr.bf16.mxu0 0
  %505 = vmatpush1.bf16.msra.mxu0 %v368
  %506 = vmatprep.subr.bf16.mxu0 0
  %507 = vmatpush1.bf16.msra.mxu0 %v369
  %508 = vmatprep.subr.bf16.mxu0 0
  %509 = vmatpush1.bf16.msra.mxu0 %v370
  %510 = vmatprep.subr.bf16.mxu0 0
  %511 = vmatpush1.bf16.msra.mxu0 %v371
  %512 = vmatprep.subr.bf16.mxu0 0
  %513 = vmatpush1.bf16.msra.mxu0 %v372
  %514 = vmatprep.subr.bf16.mxu0 0
  %515 = vmatpush1.bf16.msra.mxu0 %v373
  %516 = vmatprep.mubr.bf16.mxu0 %v37
  %517 = vmatmul.mubr.bf16.gmra.mrb[0].mxu0 %v36
  %v518 = vpop.f32.mrb[0].mxu0
  %v519 = vadd.f32 %v479, %v518
  %v520 = vpop.f32.mrb[0].mxu0
  %v521 = vpop.f32.mrb[0].mxu0
  %v522 = vpop.f32.mrb[0].mxu0
  %523 = vdwg.mxu0
  %524 = vmatprep.subr.bf16.mxu0 0
  %525 = vmatpush1.bf16.msra.mxu0 %v374
  %526 = vmatprep.subr.bf16.mxu0 0
  %527 = vmatpush1.bf16.msra.mxu0 %v375
  %528 = vmatprep.subr.bf16.mxu0 0
  %529 = vmatpush1.bf16.msra.mxu0 %v376
  %530 = vmatprep.subr.bf16.mxu0 0
  %531 = vmatpush1.bf16.msra.mxu0 %v377
  %532 = vmatprep.subr.bf16.mxu0 0
  %533 = vmatpush1.bf16.msra.mxu0 %v378
  %534 = vmatprep.subr.bf16.mxu0 0
  %535 = vmatpush1.bf16.msra.mxu0 %v379
  %536 = vmatprep.subr.bf16.mxu0 0
  %537 = vmatpush1.bf16.msra.mxu0 %v380
  %538 = vmatprep.subr.bf16.mxu0 0
  %539 = vmatpush1.bf16.msra.mxu0 %v381
  %540 = vmatprep.subr.bf16.mxu0 0
  %541 = vmatpush1.bf16.msra.mxu0 %v382
  %542 = vmatprep.subr.bf16.mxu0 0
  %543 = vmatpush1.bf16.msra.mxu0 %v383
  %544 = vmatprep.subr.bf16.mxu0 0
  %545 = vmatpush1.bf16.msra.mxu0 %v384
  %546 = vmatprep.subr.bf16.mxu0 0
  %547 = vmatpush1.bf16.msra.mxu0 %v385
  %548 = vmatprep.subr.bf16.mxu0 0
  %549 = vmatpush1.bf16.msra.mxu0 %v386
  %550 = vmatprep.subr.bf16.mxu0 0
  %551 = vmatpush1.bf16.msra.mxu0 %v387
  %552 = vmatprep.subr.bf16.mxu0 0
  %553 = vmatpush1.bf16.msra.mxu0 %v388
  %554 = vmatprep.subr.bf16.mxu0 0
  %555 = vmatpush1.bf16.msra.mxu0 %v389
  %556 = vmatprep.mubr.bf16.mxu0 %v39
  %557 = vmatmul.mubr.bf16.gmra.mrb[0].mxu0 %v38
  %v558 = vpop.f32.mrb[0].mxu0
  %v559 = vadd.f32 %v519, %v558
  %v560 = vpop.f32.mrb[0].mxu0
  %v561 = vpop.f32.mrb[0].mxu0
  %v562 = vpop.f32.mrb[0].mxu0
  %563 = vdwg.mxu0
  %564 = vmatprep.subr.bf16.mxu0 0
  %565 = vmatpush1.bf16.msra.mxu0 %v390
  %566 = vmatprep.subr.bf16.mxu0 0
  %567 = vmatpush1.bf16.msra.mxu0 0
  %568 = vmatprep.subr.bf16.mxu0 0
  %569 = vmatpush1.bf16.msra.mxu0 0
  %570 = vmatprep.subr.bf16.mxu0 0
  %571 = vmatpush1.bf16.msra.mxu0 0
  %572 = vmatprep.subr.bf16.mxu0 0
  %573 = vmatpush1.bf16.msra.mxu0 0
  %574 = vmatprep.subr.bf16.mxu0 0
  %575 = vmatpush1.bf16.msra.mxu0 0
  %576 = vmatprep.subr.bf16.mxu0 0
  %577 = vmatpush1.bf16.msra.mxu0 0
  %578 = vmatprep.subr.bf16.mxu0 0
  %579 = vmatpush1.bf16.msra.mxu0 0
  %580 = vmatprep.subr.bf16.mxu0 0
  %581 = vmatpush1.bf16.msra.mxu0 0
  %582 = vmatprep.subr.bf16.mxu0 0
  %583 = vmatpush1.bf16.msra.mxu0 0
  %584 = vmatprep.subr.bf16.mxu0 0
  %585 = vmatpush1.bf16.msra.mxu0 0
  %586 = vmatprep.subr.bf16.mxu0 0
  %587 = vmatpush1.bf16.msra.mxu0 0
  %588 = vmatprep.subr.bf16.mxu0 0
  %589 = vmatpush1.bf16.msra.mxu0 0
  %590 = vmatprep.subr.bf16.mxu0 0
  %591 = vmatpush1.bf16.msra.mxu0 0
  %592 = vmatprep.subr.bf16.mxu0 0
  %593 = vmatpush1.bf16.msra.mxu0 0
  %594 = vmatprep.subr.bf16.mxu0 0
  %595 = vmatpush1.bf16.msra.mxu0 0
  %596 = vmatprep.mubr.bf16.mxu0 0
  %597 = vmatmul.mubr.bf16.gmra.mrb[0].mxu0 %v442
  %v598 = vpop.f32.mrb[0].mxu0
  %v599 = vadd.f32 %v559, %v598
  %v600 = vpop.f32.mrb[0].mxu0
  %v601 = vpop.f32.mrb[0].mxu0
  %v602 = vpop.f32.mrb[0].mxu0
  %603 = vdwg.mxu0
  %v604 = vmax.f32 %v599, 0.0
  %v605 = vpack.c.bf16 %v604, %v604
  %v606 = vld [vmem:[%s3] sm:$0xf]
  %v607 = vld [vmem:[%s3 + $0x4] sm:$0xf]
  %v608 = vld [vmem:[%s3 + $0x8] sm:$0xf]
  %v609 = vld [vmem:[%s3 + $0xc] sm:$0xf]
  %v610 = vld [vmem:[%s4] sm:$0x1]
  %v612 = vlaneseq
  %v613 = vshrl.u32 %v612, 7
  %v614 = vsub.s32 0, %v613
  %v615 = vrot.slane %v610, %v614
  %v621 = vunpack.c.l.b16 %v606
  %v622 = vunpack.c.l.b16 %v607
  %v623 = vunpack.c.l.b16 %v608
  %v624 = vunpack.c.l.b16 %v609
  %v625 = vpack.c.b16 %v622, %v621
  %v626 = vpack.c.b16 %v624, %v623
  %vm629 = vcmask 261120
  %v631 = vsel %vm629, %v605, 0
  %633 = vmatprep.subr.bf16.mxu0 0
  %634 = vmatpush1.bf16.msra.mxu0 %v625
  %635 = vmatprep.subr.bf16.mxu0 0
  %636 = vmatpush1.bf16.msra.mxu0 %v626
  %637 = vmatprep.subr.bf16.mxu0 0
  %638 = vmatpush1.bf16.msra.mxu0 0
  %639 = vmatprep.subr.bf16.mxu0 0
  %640 = vmatpush1.bf16.msra.mxu0 0
  %641 = vmatprep.subr.bf16.mxu0 0
  %642 = vmatpush1.bf16.msra.mxu0 0
  %643 = vmatprep.subr.bf16.mxu0 0
  %644 = vmatpush1.bf16.msra.mxu0 0
  %645 = vmatprep.subr.bf16.mxu0 0
  %646 = vmatpush1.bf16.msra.mxu0 0
  %647 = vmatprep.subr.bf16.mxu0 0
  %648 = vmatpush1.bf16.msra.mxu0 0
  %649 = vmatprep.subr.bf16.mxu0 0
  %650 = vmatpush1.bf16.msra.mxu0 0
  %651 = vmatprep.subr.bf16.mxu0 0
  %652 = vmatpush1.bf16.msra.mxu0 0
  %653 = vmatprep.subr.bf16.mxu0 0
  %654 = vmatpush1.bf16.msra.mxu0 0
  %655 = vmatprep.subr.bf16.mxu0 0
  %656 = vmatpush1.bf16.msra.mxu0 0
  %657 = vmatprep.subr.bf16.mxu0 0
  %658 = vmatpush1.bf16.msra.mxu0 0
  %659 = vmatprep.subr.bf16.mxu0 0
  %660 = vmatpush1.bf16.msra.mxu0 0
  %661 = vmatprep.subr.bf16.mxu0 0
  %662 = vmatpush1.bf16.msra.mxu0 0
  %663 = vmatprep.subr.bf16.mxu0 0
  %664 = vmatpush1.bf16.msra.mxu0 0
  %665 = vmatprep.mubr.bf16.mxu0 0
  %666 = vmatmul.mubr.bf16.gmra.mrb[0].mxu0 %v631
  %v667 = vpop.f32.mrb[0].mxu0
  %v668 = vadd.f32 %v615, %v667
  %v669 = vpop.f32.mrb[0].mxu0
  %v670 = vpop.f32.mrb[0].mxu0
  %v671 = vpop.f32.mrb[0].mxu0
  %672 = vdwg.mxu0
  %v673 = vmax.f32 %v668, 0.0
  %v674 = vpack.c.bf16 %v673, %v673
  %s675 = scalar_lea.vmem %s3, 16
  %v676 = vld [vmem:[%s675] sm:$0xf]
  %v677 = vld [vmem:[%s675 + $0x4] sm:$0xf]
  %v678 = vld [vmem:[%s675 + $0x8] sm:$0xf]
  %v679 = vld [vmem:[%s675 + $0xc] sm:$0xf]
  %s680 = scalar_lea.vmem %s4, 1
  %v681 = vld [vmem:[%s680] sm:$0x1]
  %v683 = vlaneseq
  %v684 = vshrl.u32 %v683, 7
  %v685 = vsub.s32 0, %v684
  %v686 = vrot.slane %v681, %v685
  %v692 = vunpack.c.l.b16 %v676
  %v693 = vunpack.c.l.b16 %v677
  %v694 = vunpack.c.l.b16 %v678
  %v695 = vunpack.c.l.b16 %v679
  %v696 = vpack.c.b16 %v693, %v692
  %v697 = vpack.c.b16 %v695, %v694
  %v701 = vsel %vm629, %v674, 0
  %703 = vmatprep.subr.bf16.mxu0 0
  %704 = vmatpush1.bf16.msra.mxu0 %v696
  %705 = vmatprep.subr.bf16.mxu0 0
  %706 = vmatpush1.bf16.msra.mxu0 %v697
  %707 = vmatprep.subr.bf16.mxu0 0
  %708 = vmatpush1.bf16.msra.mxu0 0
  %709 = vmatprep.subr.bf16.mxu0 0
  %710 = vmatpush1.bf16.msra.mxu0 0
  %711 = vmatprep.subr.bf16.mxu0 0
  %712 = vmatpush1.bf16.msra.mxu0 0
  %713 = vmatprep.subr.bf16.mxu0 0
  %714 = vmatpush1.bf16.msra.mxu0 0
  %715 = vmatprep.subr.bf16.mxu0 0
  %716 = vmatpush1.bf16.msra.mxu0 0
  %717 = vmatprep.subr.bf16.mxu0 0
  %718 = vmatpush1.bf16.msra.mxu0 0
  %719 = vmatprep.subr.bf16.mxu0 0
  %720 = vmatpush1.bf16.msra.mxu0 0
  %721 = vmatprep.subr.bf16.mxu0 0
  %722 = vmatpush1.bf16.msra.mxu0 0
  %723 = vmatprep.subr.bf16.mxu0 0
  %724 = vmatpush1.bf16.msra.mxu0 0
  %725 = vmatprep.subr.bf16.mxu0 0
  %726 = vmatpush1.bf16.msra.mxu0 0
  %727 = vmatprep.subr.bf16.mxu0 0
  %728 = vmatpush1.bf16.msra.mxu0 0
  %729 = vmatprep.subr.bf16.mxu0 0
  %730 = vmatpush1.bf16.msra.mxu0 0
  %731 = vmatprep.subr.bf16.mxu0 0
  %732 = vmatpush1.bf16.msra.mxu0 0
  %733 = vmatprep.subr.bf16.mxu0 0
  %734 = vmatpush1.bf16.msra.mxu0 0
  %735 = vmatprep.mubr.bf16.mxu0 0
  %736 = vmatmul.mubr.bf16.gmra.mrb[0].mxu0 %v701
  %v737 = vpop.f32.mrb[0].mxu0
  %v738 = vadd.f32 %v686, %v737
  %v739 = vpop.f32.mrb[0].mxu0
  %v740 = vpop.f32.mrb[0].mxu0
  %v741 = vpop.f32.mrb[0].mxu0
  %742 = vdwg.mxu0
  %v743 = vadd.f32 %v604, %v738
  %v744 = vmax.f32 %v743, 0.0
  %v745 = vpack.c.bf16 %v744, %v744
  %s746 = scalar_lea.vmem %s3, 32
  %v747 = vld [vmem:[%s746] sm:$0xf]
  %v748 = vld [vmem:[%s746 + $0x4] sm:$0xf]
  %v749 = vld [vmem:[%s746 + $0x8] sm:$0xf]
  %v750 = vld [vmem:[%s746 + $0xc] sm:$0xf]
  %s751 = scalar_lea.vmem %s4, 2
  %v752 = vld [vmem:[%s751] sm:$0x1]
  %v754 = vlaneseq
  %v755 = vshrl.u32 %v754, 7
  %v756 = vsub.s32 0, %v755
  %v757 = vrot.slane %v752, %v756
  %v763 = vunpack.c.l.b16 %v747
  %v764 = vunpack.c.l.b16 %v748
  %v765 = vunpack.c.l.b16 %v749
  %v766 = vunpack.c.l.b16 %v750
  %v767 = vpack.c.b16 %v764, %v763
  %v768 = vpack.c.b16 %v766, %v765
  %v772 = vsel %vm629, %v745, 0
  %774 = vmatprep.subr.bf16.mxu0 0
  %775 = vmatpush1.bf16.msra.mxu0 %v767
  %776 = vmatprep.subr.bf16.mxu0 0
  %777 = vmatpush1.bf16.msra.mxu0 %v768
  %778 = vmatprep.subr.bf16.mxu0 0
  %779 = vmatpush1.bf16.msra.mxu0 0
  %780 = vmatprep.subr.bf16.mxu0 0
  %781 = vmatpush1.bf16.msra.mxu0 0
  %782 = vmatprep.subr.bf16.mxu0 0
  %783 = vmatpush1.bf16.msra.mxu0 0
  %784 = vmatprep.subr.bf16.mxu0 0
  %785 = vmatpush1.bf16.msra.mxu0 0
  %786 = vmatprep.subr.bf16.mxu0 0
  %787 = vmatpush1.bf16.msra.mxu0 0
  %788 = vmatprep.subr.bf16.mxu0 0
  %789 = vmatpush1.bf16.msra.mxu0 0
  %790 = vmatprep.subr.bf16.mxu0 0
  %791 = vmatpush1.bf16.msra.mxu0 0
  %792 = vmatprep.subr.bf16.mxu0 0
  %793 = vmatpush1.bf16.msra.mxu0 0
  %794 = vmatprep.subr.bf16.mxu0 0
  %795 = vmatpush1.bf16.msra.mxu0 0
  %796 = vmatprep.subr.bf16.mxu0 0
  %797 = vmatpush1.bf16.msra.mxu0 0
  %798 = vmatprep.subr.bf16.mxu0 0
  %799 = vmatpush1.bf16.msra.mxu0 0
  %800 = vmatprep.subr.bf16.mxu0 0
  %801 = vmatpush1.bf16.msra.mxu0 0
  %802 = vmatprep.subr.bf16.mxu0 0
  %803 = vmatpush1.bf16.msra.mxu0 0
  %804 = vmatprep.subr.bf16.mxu0 0
  %805 = vmatpush1.bf16.msra.mxu0 0
  %806 = vmatprep.mubr.bf16.mxu0 0
  %807 = vmatmul.mubr.bf16.gmra.mrb[0].mxu0 %v772
  %v808 = vpop.f32.mrb[0].mxu0
  %v809 = vadd.f32 %v757, %v808
  %v810 = vpop.f32.mrb[0].mxu0
  %v811 = vpop.f32.mrb[0].mxu0
  %v812 = vpop.f32.mrb[0].mxu0
  %813 = vdwg.mxu0
  %v814 = vmax.f32 %v809, 0.0
  %v815 = vpack.c.bf16 %v814, %v814
  %s816 = scalar_lea.vmem %s3, 48
  %v817 = vld [vmem:[%s816] sm:$0xf]
  %v818 = vld [vmem:[%s816 + $0x4] sm:$0xf]
  %v819 = vld [vmem:[%s816 + $0x8] sm:$0xf]
  %v820 = vld [vmem:[%s816 + $0xc] sm:$0xf]
  %s821 = scalar_lea.vmem %s4, 3
  %v822 = vld [vmem:[%s821] sm:$0x1]
  %v824 = vlaneseq
  %v825 = vshrl.u32 %v824, 7
  %v826 = vsub.s32 0, %v825
  %v827 = vrot.slane %v822, %v826
  %v833 = vunpack.c.l.b16 %v817
  %v834 = vunpack.c.l.b16 %v818
  %v835 = vunpack.c.l.b16 %v819
  %v836 = vunpack.c.l.b16 %v820
  %v837 = vpack.c.b16 %v834, %v833
  %v838 = vpack.c.b16 %v836, %v835
  %v842 = vsel %vm629, %v815, 0
  %844 = vmatprep.subr.bf16.mxu0 0
  %845 = vmatpush1.bf16.msra.mxu0 %v837
  %846 = vmatprep.subr.bf16.mxu0 0
  %847 = vmatpush1.bf16.msra.mxu0 %v838
  %848 = vmatprep.subr.bf16.mxu0 0
  %849 = vmatpush1.bf16.msra.mxu0 0
  %850 = vmatprep.subr.bf16.mxu0 0
  %851 = vmatpush1.bf16.msra.mxu0 0
  %852 = vmatprep.subr.bf16.mxu0 0
  %853 = vmatpush1.bf16.msra.mxu0 0
  %854 = vmatprep.subr.bf16.mxu0 0
  %855 = vmatpush1.bf16.msra.mxu0 0
  %856 = vmatprep.subr.bf16.mxu0 0
  %857 = vmatpush1.bf16.msra.mxu0 0
  %858 = vmatprep.subr.bf16.mxu0 0
  %859 = vmatpush1.bf16.msra.mxu0 0
  %860 = vmatprep.subr.bf16.mxu0 0
  %861 = vmatpush1.bf16.msra.mxu0 0
  %862 = vmatprep.subr.bf16.mxu0 0
  %863 = vmatpush1.bf16.msra.mxu0 0
  %864 = vmatprep.subr.bf16.mxu0 0
  %865 = vmatpush1.bf16.msra.mxu0 0
  %866 = vmatprep.subr.bf16.mxu0 0
  %867 = vmatpush1.bf16.msra.mxu0 0
  %868 = vmatprep.subr.bf16.mxu0 0
  %869 = vmatpush1.bf16.msra.mxu0 0
  %870 = vmatprep.subr.bf16.mxu0 0
  %871 = vmatpush1.bf16.msra.mxu0 0
  %872 = vmatprep.subr.bf16.mxu0 0
  %873 = vmatpush1.bf16.msra.mxu0 0
  %874 = vmatprep.subr.bf16.mxu0 0
  %875 = vmatpush1.bf16.msra.mxu0 0
  %876 = vmatprep.mubr.bf16.mxu0 0
  %877 = vmatmul.mubr.bf16.gmra.mrb[0].mxu0 %v842
  %v878 = vpop.f32.mrb[0].mxu0
  %v879 = vadd.f32 %v827, %v878
  %v880 = vpop.f32.mrb[0].mxu0
  %v881 = vpop.f32.mrb[0].mxu0
  %v882 = vpop.f32.mrb[0].mxu0
  %883 = vdwg.mxu0
  %v884 = vadd.f32 %v744, %v879
  %v885 = vmax.f32 %v884, 0.0
  %v886 = vpack.c.bf16 %v885, %v885
  %v887 = vld [vmem:[%s5] sm:$0xf]
  %v888 = vld [vmem:[%s5 + $0x4] sm:$0xf]
  %v889 = vld [vmem:[%s5 + $0x8] sm:$0xf]
  %v890 = vld [vmem:[%s5 + $0xc] sm:$0xf]
  %v891 = vld [vmem:[%s6] sm:$0x1]
  %v893 = vlaneseq
  %v894 = vshrl.u32 %v893, 7
  %v895 = vsub.s32 0, %v894
  %v896 = vrot.slane %v891, %v895
  %v902 = vunpack.c.l.b16 %v887
  %v903 = vunpack.c.l.b16 %v888
  %v904 = vunpack.c.l.b16 %v889
  %v905 = vunpack.c.l.b16 %v890
  %v906 = vpack.c.b16 %v903, %v902
  %v907 = vpack.c.b16 %v905, %v904
  %v911 = vsel %vm629, %v886, 0
  %913 = vmatprep.subr.bf16.mxu0 0
  %914 = vmatpush1.bf16.msra.mxu0 %v906
  %915 = vmatprep.subr.bf16.mxu0 0
  %916 = vmatpush1.bf16.msra.mxu0 %v907
  %917 = vmatprep.subr.bf16.mxu0 0
  %918 = vmatpush1.bf16.msra.mxu0 0
  %919 = vmatprep.subr.bf16.mxu0 0
  %920 = vmatpush1.bf16.msra.mxu0 0
  %921 = vmatprep.subr.bf16.mxu0 0
  %922 = vmatpush1.bf16.msra.mxu0 0
  %923 = vmatprep.subr.bf16.mxu0 0
  %924 = vmatpush1.bf16.msra.mxu0 0
  %925 = vmatprep.subr.bf16.mxu0 0
  %926 = vmatpush1.bf16.msra.mxu0 0
  %927 = vmatprep.subr.bf16.mxu0 0
  %928 = vmatpush1.bf16.msra.mxu0 0
  %929 = vmatprep.subr.bf16.mxu0 0
  %930 = vmatpush1.bf16.msra.mxu0 0
  %931 = vmatprep.subr.bf16.mxu0 0
  %932 = vmatpush1.bf16.msra.mxu0 0
  %933 = vmatprep.subr.bf16.mxu0 0
  %934 = vmatpush1.bf16.msra.mxu0 0
  %935 = vmatprep.subr.bf16.mxu0 0
  %936 = vmatpush1.bf16.msra.mxu0 0
  %937 = vmatprep.subr.bf16.mxu0 0
  %938 = vmatpush1.bf16.msra.mxu0 0
  %939 = vmatprep.subr.bf16.mxu0 0
  %940 = vmatpush1.bf16.msra.mxu0 0
  %941 = vmatprep.subr.bf16.mxu0 0
  %942 = vmatpush1.bf16.msra.mxu0 0
  %943 = vmatprep.subr.bf16.mxu0 0
  %944 = vmatpush1.bf16.msra.mxu0 0
  %945 = vmatprep.mubr.bf16.mxu0 0
  %946 = vmatmul.mubr.bf16.gmra.mrb[0].mxu0 %v911
  %v947 = vpop.f32.mrb[0].mxu0
  %v948 = vadd.f32 %v896, %v947
  %v949 = vpop.f32.mrb[0].mxu0
  %v950 = vpop.f32.mrb[0].mxu0
  %v951 = vpop.f32.mrb[0].mxu0
  %952 = vdwg.mxu0
  %v953 = vpack.c.bf16 %v948, %v948
  %vm954 = vcmask 125952
  %955 = vst.msk [vmem:[%s7] sm:$0xf] %vm954, %v953
  // Predicated region
  $region30: #{mlresblock_forward.1} parent=0 // pred_check
    _
  $region31: #{mlresblock_forward.1} parent=0 // pred_check_branch
    %957 = sbr.rel (0) target = $region33
  $region32: #{mlresblock_forward.1} parent=0 // pred_region
    _
  $region33: #{mlresblock_forward.1} parent=0 // pred_fallthru
    _
  // Predicated region
  $region34: #{mlresblock_forward.1} parent=0 // pred_check
    _
  $region35: #{mlresblock_forward.1} parent=0 // pred_check_branch
    %959 = sbr.rel (0) target = $region37
  $region36: #{mlresblock_forward.1} parent=0 // pred_region
    _
  $region37: #{mlresblock_forward.1} parent=0 // pred_fallthru
    _

</llo_original>
